<compile_context>
chip_gen: v5e
topology: v5e:2x2
jax: 0.10.0
libtpu: 0.0.40
codegen_flags: <defaults>
</compile_context>

<pallas_src>
import functools

import jax
import jax.numpy as jnp
from jax import lax
from jax.experimental import pallas as pl
from jax.experimental.pallas import tpu as pltpu


# ----------------------------------------------------------------------------
# Generation-aware VMEM numbers.
# ----------------------------------------------------------------------------
def _vmem_budget_and_limit():
    cap = 64 * 1024 * 1024                      # conservative default (v7x)
    try:
        info = pltpu.get_tpu_info()
        cap = int(getattr(info, "vmem_capacity_bytes", cap))
    except Exception:
        pass
    budget = cap // 4                           # target live working set / program
    limit = min((cap * 3) // 4, 100 * 1024 * 1024)
    return budget, int(limit)


# ----------------------------------------------------------------------------
# Kernel 1: channels_first LayerNorm (C on sublanes, pixels lane-dense) fused
#           with the 1x1 qkv projection.  Affine is folded into W/bias.
# ----------------------------------------------------------------------------
def _ln_qkv_kernel(x_ref, w_ref, b_ref, o_ref, *, eps, inv_c):
    # x_ref: (C, TL)  w_ref: (3C, C)  b_ref: (3C, 1)  o_ref: (3C, TL)
    x = x_ref[...].astype(jnp.float32)
    s1 = jnp.sum(x, axis=0, keepdims=True)                    # one-pass stats
    s2 = jnp.sum(x * x, axis=0, keepdims=True)
    mean = s1 * inv_c
    var = jnp.maximum(s2 * inv_c - mean * mean, 0.0)
    inv = lax.rsqrt(var + eps)
    xn = (x - mean) * inv                                     # LN without affine
    qkv = jnp.dot(w_ref[...], xn, preferred_element_type=jnp.float32)
    o_ref[...] = (qkv + b_ref[...]).astype(o_ref.dtype)


def _ln_qkv(xs, w_folded, b_folded, eps, *, out_dtype, vmem_budget, vmem_limit):
    """xs: (B, C, L) channels_first.  Returns (B, 3C, L) in `out_dtype`."""
    B, C, L = xs.shape
    C3 = w_folded.shape[0]

    # Live VMEM per lane column: 2x f32 input block + 2x out block + f32 temps.
    bytes_per_col = 2 * 4 * C + 2 * jnp.dtype(out_dtype).itemsize * C3 \
        + 4 * (2 * C + C3) + 4 * C
    max_tl = max(128, vmem_budget // int(bytes_per_col))
    if L <= max_tl:
        tl = L                                    # full extent is always legal
    else:
        tl = max(128, (max_tl // 128) * 128)      # partial tiles must be %128
    # >=2 grid programs so v7x's two TensorCores both get work.
    if B * pl.cdiv(L, tl) < 2 and L > 128:
        tl = max(128, ((pl.cdiv(L, 2) + 127) // 128) * 128)

    cost = pl.CostEstimate(
        flops=int(B * L * (2 * C3 * C + 8 * C)),
        transcendentals=int(B * L),
        bytes_accessed=int(4 * B * C * L
                           + jnp.dtype(out_dtype).itemsize * B * C3 * L
                           + 4 * C3 * (C + 1)),
    )

    return pl.pallas_call(
        functools.partial(_ln_qkv_kernel, eps=eps, inv_c=1.0 / C),
        out_shape=jax.ShapeDtypeStruct((B, C3, L), out_dtype),
        grid_spec=pltpu.PrefetchScalarGridSpec(
            num_scalar_prefetch=0,
            grid=(B, pl.cdiv(L, tl)),
            in_specs=[
                pl.BlockSpec((None, C, tl), lambda b, t: (b, 0, t)),
                pl.BlockSpec((C3, C), lambda b, t: (0, 0)),
                pl.BlockSpec((C3, 1), lambda b, t: (0, 0)),
            ],
            out_specs=pl.BlockSpec((None, C3, tl), lambda b, t: (b, 0, t)),
        ),
        compiler_params=pltpu.CompilerParams(
            dimension_semantics=("parallel", "parallel"),
            vmem_limit_bytes=vmem_limit),
        cost_estimate=cost,
    )(xs, w_folded, b_folded)


# ----------------------------------------------------------------------------
# Kernel 2: per-(batch, head, query-row-tile) attention + fused depthwise
#           ConvTranspose2d (k=r, stride=r, groups=C) with in-kernel interleave.
# ----------------------------------------------------------------------------
def _attn_local_prop_kernel(q_ref, k_ref, v_ref, e_ref, wq_ref, b_ref, o_ref,
                            *, hp_block, wp):
    # q_ref: (d, tq) bf16   k_ref/v_ref: (d, L) bf16   e_ref: (Wp, W) f32
    # wq_ref: (d, r, W) f32  b_ref: (d, 1) f32  o_ref: (d, hp_block, r, W)
    q = q_ref[...]
    k = k_ref[...]
    v = v_ref[...]

    # s[l, m] = sum_c q[c, l] k[c, m]; original forward applies no 1/sqrt(d) scale.
    s = lax.dot_general(q, k, (((0,), (0,)), ((), ())),
                        preferred_element_type=jnp.float32)        # (tq, L)
    s = s - jnp.max(s, axis=-1, keepdims=True)
    p = jnp.exp(s)
    denom = jnp.sum(p, axis=-1, keepdims=True)                     # (tq, 1)

    # o[c, l] = sum_m v[c, m] p[l, m]; softmax normalisation deferred past the
    # matmul (d multiplies per pixel instead of L) -> EUP reciprocal, VPU relief.
    o = lax.dot_general(v, p.astype(v.dtype), (((1,), (1,)), ((), ())),
                        preferred_element_type=jnp.float32)        # (d, tq)
    o = o * jnp.transpose(pl.reciprocal(denom, approx=True))       # (d, tq)

    e = e_ref[...]                    # 0/1 lane-expansion matrix (Wp, Wp*r)
    wq = wq_ref[...]                  # depthwise weights tiled over wp: (d, r, W)
    bias = b_ref[...][:, :, None]     # (d, 1, 1)
    for hl in range(hp_block):        # static, small unroll (one low-res row each)
        o_row = o[:, hl * wp:(hl + 1) * wp]                        # (d, Wp)
        # lane expansion wp -> wp*r+dj done on the MXU (exact: one 1.0 per row)
        o_up = jnp.dot(o_row, e, preferred_element_type=jnp.float32)   # (d, W)
        o_ref[:, hl, :, :] = (o_up[:, None, :] * wq + bias).astype(o_ref.dtype)


def _pick_hp_block(hp, wp, L, d, budget):
    """Largest divisor hb of Hp such that the query tile tq = hb*Wp is a legal
    lane tile (tq % 128 == 0 or tq == L), fits the VMEM score budget and keeps
    the static store unroll modest."""
    avail = budget - 16 * d * L                 # double-buffered bf16 k/v blocks
    max_tq = max(wp, avail // max(1, 12 * L))   # ~ s + p + slack, f32
    tq_cap = min(max_tq, 512)
    legal = [hb for hb in range(1, hp + 1)
             if hp % hb == 0 and ((hb * wp) % 128 == 0 or hb * wp == L)]
    fitting = [hb for hb in legal if hb * wp <= tq_cap]
    if fitting:
        return fitting[-1]
    return legal[0] if legal else hp


def _attn_local_prop(qkv, e_mat, w_exp, b3, *, heads, head_dim, hp_pix, wp_pix,
                     r, out_dtype, vmem_budget, vmem_limit):
    """qkv: (B, 3C, L) with channel order [h0:(q,k,v), h1:(q,k,v), ...]
    (this is exactly qkv(x).view(B, heads, 3d, HW).split([d,d,d], dim=2)).
    Returns (B, C, Hp, r, Wp*r) which reshapes for free to (B, C, H, W)."""
    B, _, L = qkv.shape
    d = head_dim
    W = wp_pix * r

    hp_block = _pick_hp_block(hp_pix, wp_pix, L, d, vmem_budget)
    tq = hp_block * wp_pix
    T = hp_pix // hp_block

    cost = pl.CostEstimate(
        flops=int(B * heads * (4 * d * L * L + 6 * L * L
                               + 2 * d * L * W + 4 * d * L * r * r)),
        transcendentals=int(B * heads * L * L),
        bytes_accessed=int(B * heads * 3 * d * L * qkv.dtype.itemsize
                           + B * heads * d * hp_pix * r * W * 4),
    )

    return pl.pallas_call(
        functools.partial(_attn_local_prop_kernel, hp_block=hp_block, wp=wp_pix),
        out_shape=jax.ShapeDtypeStruct((B, heads * d, hp_pix, r, W), out_dtype),
        grid_spec=pltpu.PrefetchScalarGridSpec(
            num_scalar_prefetch=0,
            grid=(B, heads, T),
            in_specs=[
                # q tile of head h (channel block 3h), columns [t*tq, (t+1)*tq)
                pl.BlockSpec((None, d, tq), lambda b, h, t: (b, 3 * h, t)),
                # k / v of head h, full L; index constant over t -> VMEM resident
                pl.BlockSpec((None, d, L), lambda b, h, t: (b, 3 * h + 1, 0)),
                pl.BlockSpec((None, d, L), lambda b, h, t: (b, 3 * h + 2, 0)),
                pl.BlockSpec((wp_pix, W), lambda b, h, t: (0, 0)),
                pl.BlockSpec((None, d, r, W), lambda b, h, t: (h, 0, 0, 0)),
                pl.BlockSpec((None, d, 1), lambda b, h, t: (h, 0, 0)),
            ],
            out_specs=pl.BlockSpec((None, d, hp_block, r, W),
                                   lambda b, h, t: (b, h, t, 0, 0)),
        ),
        compiler_params=pltpu.CompilerParams(
            dimension_semantics=("parallel", "parallel", "parallel"),
            vmem_limit_bytes=vmem_limit),
        cost_estimate=cost,
    )(qkv, qkv, qkv, e_mat, w_exp, b3)


# ----------------------------------------------------------------------------
# Full module forward.
# ----------------------------------------------------------------------------
def global_sparse_attention(x, ln_w, ln_b, w_qkv, w_dw, b_dw, *, heads, r,
                            eps=1e-6):
    """Forward of GlobalSparseAttetionModule (eval mode).

    x     : (B, C, H, W)   channels_first input
    ln_w / ln_b : (C,)     LayerNorm affine params
    w_qkv : (3C, C) or (3C, C, 1, 1)   1x1 conv weight (no bias)
    w_dw  : (C, 1, r, r)   depthwise ConvTranspose2d weight
    b_dw  : (C,)           depthwise ConvTranspose2d bias
    """
    B, C, H, W = x.shape
    assert C % heads == 0, "channels must be divisible by heads"
    d = C // heads
    assert d % 8 == 0, "head_dim must be a multiple of 8 for the TPU block layout"

    # sparse_sampler: AvgPool2d(kernel=1, stride=r) == strided subsample.
    # TODO(synk): the strided gather itself stays in XLA (a stride-r window is
    # not expressible with a rectangular BlockSpec).
    xs = x[:, :, ::r, ::r]
    Hp, Wp = xs.shape[2], xs.shape[3]
    L = Hp * Wp
    Wo = Wp * r
    xs = xs.reshape(B, C, L).astype(jnp.float32)

    vmem_budget, vmem_limit = _vmem_budget_and_limit()

    # Fold LayerNorm affine into the 1x1 conv:  W @ (g*xn + b) = (W*g) @ xn + W@b
    w0 = w_qkv.reshape(3 * C, C).astype(jnp.float32)
    w_folded = w0 * ln_w.astype(jnp.float32)[None, :]
    b_folded = (w0 @ ln_b.astype(jnp.float32)).reshape(3 * C, 1)

    # Kernel 1: channels_first LayerNorm + 1x1 qkv projection, qkv stored bf16
    # (kernel 2 accumulates in f32; halves the HBM traffic of this hop).
    qkv = _ln_qkv(xs, w_folded, b_folded, eps, out_dtype=jnp.bfloat16,
                  vmem_budget=vmem_budget, vmem_limit=vmem_limit)   # (B, 3C, L)

    # Host-side constants for the fused depthwise ConvTranspose2d:
    #   e_mat[wp, wp*r+dj] = 1   (exact lane expansion on the MXU)
    #   w_exp[h, c, di, wp*r+dj] = w_dw[h*d+c, 0, di, dj]
    e_mat = jnp.repeat(jnp.eye(Wp, dtype=jnp.float32), r, axis=1)        # (Wp, Wo)
    w4 = w_dw.reshape(C, r, r).astype(jnp.float32)
    w_exp = jnp.tile(w4[:, :, None, :], (1, 1, Wp, 1)).reshape(heads, d, r, Wo)
    b3 = b_dw.astype(jnp.float32).reshape(heads, d, 1)

    # Kernel 2: attention + depthwise transposed conv, written directly in a
    # (B, C, Hp, r, Wp*r) layout -> the reshape below is free (no HBM pass).
    y5 = _attn_local_prop(qkv, e_mat, w_exp, b3, heads=heads, head_dim=d,
                          hp_pix=Hp, wp_pix=Wp, r=r, out_dtype=x.dtype,
                          vmem_budget=vmem_budget, vmem_limit=vmem_limit)

    # TODO(synk): Dropout(0.2) is identity in eval mode; training-mode dropout
    # (pltpu PRNG mask) is not implemented.
    return y5.reshape(B, C, Hp * r, Wp * r)


# ----------------------------------------------------------------------------
# Pure-JAX reference (mirrors the PyTorch forward exactly, all f32).
# ----------------------------------------------------------------------------
def _reference(x, ln_w, ln_b, w_qkv, w_dw, b_dw, *, heads, r, eps):
    B, C, H, W = x.shape
    d = C // heads
    u = jnp.mean(x, axis=1, keepdims=True)
    s = jnp.mean((x - u) ** 2, axis=1, keepdims=True)
    xn = (x - u) / jnp.sqrt(s + eps)
    xn = ln_w[None, :, None, None] * xn + ln_b[None, :, None, None]
    xs = xn[:, :, ::r, ::r]
    Hp, Wp = xs.shape[2], xs.shape[3]
    L = Hp * Wp
    qkv = jnp.einsum('oc,bcl->bol', w_qkv.reshape(3 * C, C), xs.reshape(B, C, L))
    qkv = qkv.reshape(B, heads, 3 * d, L)
    q, k, v = qkv[:, :, :d], qkv[:, :, d:2 * d], qkv[:, :, 2 * d:]
    attn = jax.nn.softmax(jnp.einsum('bhdl,bhdm->bhlm', q, k), axis=-1)
    o = jnp.einsum('bhdm,bhlm->bhdl', v, attn).reshape(B, C, Hp, Wp)
    y = jnp.einsum('bchw,cij->bchiwj', o, w_dw[:, 0])
    y = y.reshape(B, C, Hp * r, Wp * r) + b_dw[None, :, None, None]
    return y


if __name__ == "__main__":
    key = jax.random.PRNGKey(0)
    k1, k2, k3, k4 = jax.random.split(key, 4)

    # Small shapes consistent with the module: channels=32, r=2, heads=2.
    B, C, H, W = 2, 32, 16, 16
    heads, r = 2, 2
    eps = 1e-6

    x = jax.random.normal(k1, (B, C, H, W), dtype=jnp.float32)
    ln_w = jnp.ones((C,), jnp.float32)
    ln_b = jnp.zeros((C,), jnp.float32)
    w_qkv = 0.1 * jax.random.normal(k2, (3 * C, C), dtype=jnp.float32)
    w_dw = 0.2 * jax.random.normal(k3, (C, 1, r, r), dtype=jnp.float32)
    b_dw = 0.1 * jax.random.normal(k4, (C,), dtype=jnp.float32)

    y = global_sparse_attention(x, ln_w, ln_b, w_qkv, w_dw, b_dw,
                                heads=heads, r=r, eps=eps)
    y = jax.block_until_ready(y)

    ref = _reference(x, ln_w, ln_b, w_qkv, w_dw, b_dw, heads=heads, r=r, eps=eps)
    err = float(jnp.max(jnp.abs(y - ref)))
    assert y.shape == (B, C, H, W), y.shape
    # bf16 qkv intermediate + bf16 MXU operands + approx reciprocal => loose tol.
    assert err < 5e-2, f"max abs err {err}"

    print("KERNEL_OK")
</pallas_src>

<mosaic_0001>
module attributes {stable_mosaic.version = 11 : i64} {
  func.func @_ln_qkv_kernel(%arg0: i32, %arg1: i32, %arg2: memref<1x32x64xf32, #tpu.memory_space<vmem>>, %arg3: memref<96x32xf32, #tpu.memory_space<vmem>>, %arg4: memref<96x1xf32, #tpu.memory_space<vmem>>, %arg5: memref<1x96x64xbf16, #tpu.memory_space<vmem>>) attributes {dimension_semantics = [#tpu.dimension_semantics<parallel>, #tpu.dimension_semantics<parallel>], iteration_bounds = array<i64: 2, 1>, scalar_prefetch = 0 : i64, scratch_operands = 0 : i64, tpu.core_type = #tpu.core_type<tc>, window_params = [{transform_indices = @transform_0, window_bounds = array<i64: 1, 32, 64>}, {pipeline_mode = #tpu.pipeline_mode<synchronous>, transform_indices = @transform_1, window_bounds = array<i64: 96, 32>}, {pipeline_mode = #tpu.pipeline_mode<synchronous>, transform_indices = @transform_2, window_bounds = array<i64: 96, 1>}, {transform_indices = @transform_3, window_bounds = array<i64: 1, 96, 64>}]} {
    %c0 = arith.constant 0 : index
    %c0_0 = arith.constant 0 : index
    %c0_1 = arith.constant 0 : index
    %0 = vector.load %arg2[%c0, %c0_0, %c0_1] : memref<1x32x64xf32, #tpu.memory_space<vmem>>, vector<1x32x64xf32>
    %1 = vector.shape_cast %0 : vector<1x32x64xf32> to vector<32x64xf32>
    %cst = arith.constant dense<0.000000e+00> : vector<64xf32>
    %2 = vector.multi_reduction <add>, %1, %cst [0] : vector<32x64xf32> to vector<64xf32>
    %3 = vector.shape_cast %2 : vector<64xf32> to vector<1x64xf32>
    %4 = arith.mulf %1, %1 : vector<32x64xf32>
    %cst_2 = arith.constant dense<0.000000e+00> : vector<64xf32>
    %5 = vector.multi_reduction <add>, %4, %cst_2 [0] : vector<32x64xf32> to vector<64xf32>
    %6 = vector.shape_cast %5 : vector<64xf32> to vector<1x64xf32>
    %cst_3 = arith.constant 3.125000e-02 : f32
    %7 = vector.broadcast %cst_3 : f32 to vector<1x64xf32>
    %8 = arith.mulf %3, %7 : vector<1x64xf32>
    %cst_4 = arith.constant 3.125000e-02 : f32
    %9 = vector.broadcast %cst_4 : f32 to vector<1x64xf32>
    %10 = arith.mulf %6, %9 : vector<1x64xf32>
    %11 = arith.mulf %8, %8 : vector<1x64xf32>
    %12 = arith.subf %10, %11 : vector<1x64xf32>
    %cst_5 = arith.constant 0.000000e+00 : f32
    %13 = vector.broadcast %cst_5 : f32 to vector<1x64xf32>
    %14 = arith.maximumf %12, %13 : vector<1x64xf32>
    %cst_6 = arith.constant 9.99999997E-7 : f32
    %15 = vector.broadcast %cst_6 : f32 to vector<1x64xf32>
    %16 = arith.addf %14, %15 : vector<1x64xf32>
    %17 = math.rsqrt %16 : vector<1x64xf32>
    %18 = vector.broadcast %8 : vector<1x64xf32> to vector<32x64xf32>
    %19 = arith.subf %1, %18 : vector<32x64xf32>
    %20 = vector.broadcast %17 : vector<1x64xf32> to vector<32x64xf32>
    %21 = arith.mulf %19, %20 : vector<32x64xf32>
    %c0_7 = arith.constant 0 : index
    %c0_8 = arith.constant 0 : index
    %22 = vector.load %arg3[%c0_7, %c0_8] : memref<96x32xf32, #tpu.memory_space<vmem>>, vector<96x32xf32>
    %cst_9 = arith.constant dense<0.000000e+00> : vector<96x64xf32>
    %23 = tpu.matmul %22, %21, %cst_9 {dimension_numbers = #tpu.dot_dimension_numbers<[1], [0], [0], [1], [0, 0, 1, 1], [], []>} : vector<96x32xf32>, vector<32x64xf32>, vector<96x64xf32> -> vector<96x64xf32>
    %c0_10 = arith.constant 0 : index
    %c0_11 = arith.constant 0 : index
    %24 = vector.load %arg4[%c0_10, %c0_11] : memref<96x1xf32, #tpu.memory_space<vmem>>, vector<96x1xf32>
    %25 = vector.broadcast %24 : vector<96x1xf32> to vector<96x64xf32>
    %26 = arith.addf %23, %25 : vector<96x64xf32>
    %27 = arith.truncf %26 : vector<96x64xf32> to vector<96x64xbf16>
    %c0_12 = arith.constant 0 : index
    %c0_13 = arith.constant 0 : index
    %c0_14 = arith.constant 0 : index
    %28 = vector.load %arg5[%c0_12, %c0_13, %c0_14] : memref<1x96x64xbf16, #tpu.memory_space<vmem>>, vector<1x96x64xbf16>
    %29 = vector.shape_cast %28 : vector<1x96x64xbf16> to vector<96x64xbf16>
    %30 = vector.shape_cast %27 : vector<96x64xbf16> to vector<1x96x64xbf16>
    tpu.vector_store %arg5[%c0_12, %c0_13, %c0_14], %30 {strides = array<i32>} : memref<1x96x64xbf16, #tpu.memory_space<vmem>>, vector<1x96x64xbf16>,
    return
  }
  func.func @transform_0(%arg0: i32, %arg1: i32) -> (i32, i32, i32) {
    %c0_i32 = arith.constant 0 : i32
    %c0_i32_0 = arith.constant 0 : i32
    return %arg0, %c0_i32, %arg1 : i32, i32, i32
  }
  func.func @transform_1(%arg0: i32, %arg1: i32) -> (i32, i32) {
    %c0_i32 = arith.constant 0 : i32
    %c0_i32_0 = arith.constant 0 : i32
    %c0_i32_1 = arith.constant 0 : i32
    return %c0_i32, %c0_i32_0 : i32, i32
  }
  func.func @transform_2(%arg0: i32, %arg1: i32) -> (i32, i32) {
    %c0_i32 = arith.constant 0 : i32
    %c0_i32_0 = arith.constant 0 : i32
    %c0_i32_1 = arith.constant 0 : i32
    return %c0_i32, %c0_i32_0 : i32, i32
  }
  func.func @transform_3(%arg0: i32, %arg1: i32) -> (i32, i32, i32) {
    %c0_i32 = arith.constant 0 : i32
    %c0_i32_0 = arith.constant 0 : i32
    return %arg0, %c0_i32, %arg1 : i32, i32, i32
  }
}

</mosaic_0001>

<llo_original>
// kernel: tpu_custom_call.1
$region0: #{tpu_custom_call.1}
  #allocation0 [shape = 'u32[]', space=smem, size = 0x4, offset = 0x4, fixed_abs, tag = 'smem constant byte address 0x4 - core index']
  #allocation1 [shape = 'u32[72,128]{1,0:T(1,128)}', space=vmem, size = 0x9000, scoped, tag = 'internal scratch']
  %s0 = inlined_call_operand.vmem [shape: f32[2,32,64], index: 0, kind: input, shape index: {}]
  %s1 = inlined_call_operand.vmem [shape: f32[96,32], index: 1, kind: input, shape index: {}]
  %s2 = inlined_call_operand.vmem [shape: f32[96,1], index: 2, kind: input, shape index: {}]
  %s3 = inlined_call_operand.vmem [shape: bf16[2,96,64], index: 3, kind: output, shape index: {}]
  %s4 = sld [smem:[#allocation0]]
  $region45: #{tpu_custom_call.1} parent=0
    _
  %s6 = ssub.s32 1, %s4
  %s7 = scalar_select 0, %s6, %s4
  loop: start=0, step=1, limit=4
  $region2: #{tpu_custom_call.1} parent=0 // loop_pre_header
    _
  $region3: #{tpu_custom_call.1} parent=0 // loop_header
    %s9 = sphi 0, %s13
    %p10 = scmp.ge.s32.totalorder %s9, 4
    %s16 = sphi 0, %s28
    %s17 = sphi 0, %s24
    %s18 = sphi 0, %s16
    %s19 = sphi 0, %s17
    %s20 = sphi 0, %s18
    %s21 = sphi 0, %s19
    %s33 = sphi 0, %s35
    %s36 = sphi 0, %s33
    %s37 = sphi 0, %s36
    %s53 = sphi 0, %s37
    %s57 = sphi 0, %s57
    %s59 = sphi 0, %s57
    %s60 = sphi 0, %s59
    %s74 = sphi 0, %s60
    %s78 = sphi 0, %s78
    %s80 = sphi 0, %s78
    %s81 = sphi 0, %s80
    %s95 = sphi 0, %s81
    %s103 = sphi 0, %s105
    %s106 = sphi 0, %s103
    %s107 = sphi 0, %s106
    %s123 = sphi 0, %s107
  $region4: #{tpu_custom_call.1} parent=0 // loop_header_branch
    %12 = sbr.rel (%p10) target = $region8
  $region5: #{tpu_custom_call.1} parent=0 // loop_body
    %s14 = ssub.s32 %s9, 1
    %s15 = ssub.s32 %s9, 2
    %s22 = sadd.s32 1, %s17
    %p23 = scmp.ge.s32.totalorder %s22, 1
    %s24 = scalar_select %p23, 0, %s22
    %s25 = sadd.s32 1, %s16
    %s26 = scalar_select %p23, %s25, %s16
    %p27 = scmp.ge.s32.totalorder %s26, 2
    %s28 = scalar_select %p27, 0, %s26
    %s29 = ssub.s32 %s16, %s28
    %s30 = ssub.s32 %s17, %s24
    %s31 = sor.u32 %s29, %s30
    %p32 = scmp.eq.s32.totalorder %s31, 0
    %s34 = sadd.s32 %s33, 1
    %s35 = scalar_select %p32, %s33, %s34
    %p38 = pneg %p32
    %p39 = scmp.eq.s32.totalorder %s9, 1
    %p40 = por %p38, %p39
    %p41 = scmp.ne.s32.totalorder %s33, %s36
    %p42 = scmp.eq.s32.totalorder %s9, 0
    %p43 = por %p41, %p42
    %p44 = scmp.ne.s32.totalorder %s33, %s36
    %p45 = scmp.eq.s32.totalorder %s14, 1
    %p46 = por %p44, %p45
    %p47 = scmp.ne.s32.totalorder %s36, %s37
    %p48 = scmp.eq.s32.totalorder %s14, 0
    %p49 = por %p47, %p48
    %p50 = scmp.ne.s32.totalorder %s36, %s37
    %p51 = scmp.eq.s32.totalorder %s15, 1
    %p52 = por %p50, %p51
    %p54 = scmp.ne.s32.totalorder %s37, %s53
    %p55 = scmp.eq.s32.totalorder %s15, 0
    %p56 = por %p54, %p55
    %s58 = sadd.s32 %s57, 1
    %p61 = scmp.eq.s32.totalorder %s9, 1
    %p62 = scmp.ne.s32.totalorder %s57, %s59
    %p63 = scmp.eq.s32.totalorder %s9, 0
    %p64 = por %p62, %p63
    %p65 = scmp.ne.s32.totalorder %s57, %s59
    %p66 = scmp.eq.s32.totalorder %s14, 1
    %p67 = por %p65, %p66
    %p68 = scmp.ne.s32.totalorder %s59, %s60
    %p69 = scmp.eq.s32.totalorder %s14, 0
    %p70 = por %p68, %p69
    %p71 = scmp.ne.s32.totalorder %s59, %s60
    %p72 = scmp.eq.s32.totalorder %s15, 1
    %p73 = por %p71, %p72
    %p75 = scmp.ne.s32.totalorder %s60, %s74
    %p76 = scmp.eq.s32.totalorder %s15, 0
    %p77 = por %p75, %p76
    %s79 = sadd.s32 %s78, 1
    %p82 = scmp.eq.s32.totalorder %s9, 1
    %p83 = scmp.ne.s32.totalorder %s78, %s80
    %p84 = scmp.eq.s32.totalorder %s9, 0
    %p85 = por %p83, %p84
    %p86 = scmp.ne.s32.totalorder %s78, %s80
    %p87 = scmp.eq.s32.totalorder %s14, 1
    %p88 = por %p86, %p87
    %p89 = scmp.ne.s32.totalorder %s80, %s81
    %p90 = scmp.eq.s32.totalorder %s14, 0
    %p91 = por %p89, %p90
    %p92 = scmp.ne.s32.totalorder %s80, %s81
    %p93 = scmp.eq.s32.totalorder %s15, 1
    %p94 = por %p92, %p93
    %p96 = scmp.ne.s32.totalorder %s81, %s95
    %p97 = scmp.eq.s32.totalorder %s15, 0
    %p98 = por %p96, %p97
    %s99 = ssub.s32 %s16, %s28
    %s100 = ssub.s32 %s17, %s24
    %s101 = sor.u32 %s99, %s100
    %p102 = scmp.eq.s32.totalorder %s101, 0
    %s104 = sadd.s32 %s103, 1
    %s105 = scalar_select %p102, %s103, %s104
    %p108 = pneg %p102
    %p109 = scmp.eq.s32.totalorder %s9, 1
    %p110 = por %p108, %p109
    %p111 = scmp.ne.s32.totalorder %s103, %s106
    %p112 = scmp.eq.s32.totalorder %s9, 0
    %p113 = por %p111, %p112
    %p114 = scmp.ne.s32.totalorder %s103, %s106
    %p115 = scmp.eq.s32.totalorder %s14, 1
    %p116 = por %p114, %p115
    %p117 = scmp.ne.s32.totalorder %s106, %s107
    %p118 = scmp.eq.s32.totalorder %s14, 0
    %p119 = por %p117, %p118
    %p120 = scmp.ne.s32.totalorder %s106, %s107
    %p121 = scmp.eq.s32.totalorder %s15, 1
    %p122 = por %p120, %p121
    %p124 = scmp.ne.s32.totalorder %s107, %s123
    %p125 = scmp.eq.s32.totalorder %s15, 0
    %p126 = por %p124, %p125
    %p127 = scmp.le.s32.totalorder 1, %s9
    %p128 = scmp.lt.s32.totalorder %s9, 3
    %p129 = pnand %p127, %p128
    %p130 = pneg %p129
    // Predicated region
    $region9: #{tpu_custom_call.1} parent=5 // pred_check
      _
    $region10: #{tpu_custom_call.1} parent=5 // pred_check_branch
      %132 = sbr.rel (%p129) target = $region12
    $region11: #{tpu_custom_call.1} parent=5 // pred_region
      %s133 = ssub.s32 %s9, 1
      // Predicated region
      $region13: #{tpu_custom_call.1} parent=11 // pred_check
        %p134 = pneg %p70
      $region14: #{tpu_custom_call.1} parent=11 // pred_check_branch
        %136 = sbr.rel (%p134) target = $region16
      $region15: #{tpu_custom_call.1} parent=11 // pred_region
        _
      $region16: #{tpu_custom_call.1} parent=11 // pred_fallthru
        _
      // Predicated region
      $region17: #{tpu_custom_call.1} parent=11 // pred_check
        %p137 = pneg %p91
      $region18: #{tpu_custom_call.1} parent=11 // pred_check_branch
        %139 = sbr.rel (%p137) target = $region20
      $region19: #{tpu_custom_call.1} parent=11 // pred_region
        _
      $region20: #{tpu_custom_call.1} parent=11 // pred_fallthru
        _
    $region12: #{tpu_custom_call.1} parent=5 // pred_fallthru
      _
    %p140 = scmp.lt.s32.totalorder %s9, 2
    // Predicated region
    $region21: #{tpu_custom_call.1} parent=5 // pred_check
      %p141 = pneg %p140
    $region22: #{tpu_custom_call.1} parent=5 // pred_check_branch
      %143 = sbr.rel (%p141) target = $region24
    $region23: #{tpu_custom_call.1} parent=5 // pred_region
      // Predicated region
      $region25: #{tpu_custom_call.1} parent=23 // pred_check
        %p144 = pneg %p43
      $region26: #{tpu_custom_call.1} parent=23 // pred_check_branch
        %146 = sbr.rel (%p144) target = $region28
      $region27: #{tpu_custom_call.1} parent=23 // pred_region
        %p147 = scmp.lt.s32.totalorder %s16, 1
        %s148 = scalar_select %p147, %s16, 1
        %p149 = scmp.lt.s32.totalorder %s17, 0
        %s150 = scalar_select %p149, %s17, 0
        %s151 = smul.addr %s148, 4
        %s152 = sadd.s32 %s150, %s151
        %s153 = smul.addr %s152, 8
        %s154 = scalar_lea.vmem %s0, %s153
      $region28: #{tpu_custom_call.1} parent=23 // pred_fallthru
        _
    $region24: #{tpu_custom_call.1} parent=5 // pred_fallthru
      _
    %p155 = scmp.le.s32.totalorder 1, %s9
    %p156 = scmp.lt.s32.totalorder %s9, 3
    %p157 = pnand %p155, %p156
    %p158 = pneg %p157
    // Predicated region
    $region29: #{tpu_custom_call.1} parent=5 // pred_check
      _
    $region30: #{tpu_custom_call.1} parent=5 // pred_check_branch
      %160 = sbr.rel (%p157) target = $region32
    $region31: #{tpu_custom_call.1} parent=5 // pred_region
      %s161 = ssub.s32 %s9, 1
      %p162 = scmp.lt.s32.totalorder %s18, 1
      %s163 = scalar_select %p162, %s18, 1
      %p164 = scmp.lt.s32.totalorder %s19, 0
      %s165 = scalar_select %p164, %s19, 0
      %s166 = smul.addr %s163, 4
      %s167 = sadd.s32 %s165, %s166
      %s168 = smul.addr %s167, 8
      %s169 = scalar_lea.vmem %s0, %s168
      %p170 = pneg %p49
      %p171 = pneg %p46
      %p172 = pneg %p70
      %p173 = pneg %p67
      %p174 = pneg %p91
      %p175 = pneg %p88
      %p176 = pneg %p119
      %p177 = pneg %p116
      %p178 = scmp.lt.s32.totalorder %s18, 1
      %s179 = scalar_select %p178, %s18, 1
      %p180 = scmp.lt.s32.totalorder %s19, 0
      %s181 = scalar_select %p180, %s19, 0
      %s182 = smul.addr %s179, 12
      %s183 = sadd.s32 %s181, %s182
      %s184 = smul.addr %s183, 4
      %s185 = scalar_lea.vmem %s3, %s184
      %p186 = scmp.lt.s32.totalorder %s18, 1
      %s187 = scalar_select %p186, %s18, 1
      %p188 = scmp.lt.s32.totalorder %s19, 0
      %s189 = scalar_select %p188, %s19, 0
      %s190 = smul.addr %s187, 4
      %s191 = sadd.s32 %s189, %s190
      %s192 = smul.addr %s191, 8
      %s193 = scalar_lea.vmem %s0, %s192
      %p194 = scmp.lt.s32.totalorder %s18, 1
      %s195 = scalar_select %p194, %s18, 1
      %p196 = scmp.lt.s32.totalorder %s19, 0
      %s197 = scalar_select %p196, %s19, 0
      %s198 = smul.addr %s195, 12
      %s199 = sadd.s32 %s197, %s198
      %s200 = smul.addr %s199, 4
      %s201 = scalar_lea.vmem %s3, %s200
      %v202 = vld [vmem:[%s193] sm:$0xff]
      %v203 = vld [vmem:[%s193 + $0x8] sm:$0xff]
      %v204 = vld [vmem:[%s193 + $0x10] sm:$0xff]
      %v205 = vld [vmem:[%s193 + $0x18] sm:$0xff]
      %vm206 = vcmask 523264
      %v207 = vsel %vm206, %v202, 0.0
      %v208 = vsel %vm206, %v203, 0.0
      %v209 = vadd.f32 %v207, %v208
      %v210 = vsel %vm206, %v204, 0.0
      %v211 = vadd.f32 %v209, %v210
      %v212 = vsel %vm206, %v205, 0.0
      %v213 = vadd.f32 %v211, %v212
      %v214 = vrot.slane %v213, 4
      %v215 = vadd.f32 %v213, %v214
      %v216 = vrot.slane %v215, 2
      %v217 = vadd.f32 %v215, %v216
      %v218 = vrot.slane %v217, 1
      %v219 = vadd.f32 %v217, %v218
      %v220 = vmul.f32 %v202, %v202
      %v221 = vmul.f32 %v203, %v203
      %v222 = vmul.f32 %v204, %v204
      %v223 = vmul.f32 %v205, %v205
      %v224 = vsel %vm206, %v220, 0.0
      %v225 = vsel %vm206, %v221, 0.0
      %v226 = vadd.f32 %v224, %v225
      %v227 = vsel %vm206, %v222, 0.0
      %v228 = vadd.f32 %v226, %v227
      %v229 = vsel %vm206, %v223, 0.0
      %v230 = vadd.f32 %v228, %v229
      %v231 = vrot.slane %v230, 4
      %v232 = vadd.f32 %v230, %v231
      %v233 = vrot.slane %v232, 2
      %v234 = vadd.f32 %v232, %v233
      %v235 = vrot.slane %v234, 1
      %v236 = vadd.f32 %v234, %v235
      %v237 = vmul.f32 %v219, 0.03125
      %v238 = vmul.f32 %v236, 0.03125
      %v239 = vmul.f32 %v237, %v237
      %v240 = vsub.f32 %v238, %v239
      %v241 = vmax.f32 %v240, 0.0
      %v242 = vadd.f32 %v241, 1e-06
      %v243 = vrsqrt.pop %v242
      %v244 = vmul.f32 %v243, %v242
      %v245 = vmul.f32 %v244, %v243
      %v246 = vmul.f32 0.5, %v245
      %v247 = vsub.f32 1.5, %v246
      %v248 = vmul.f32 %v243, %v247
      %vm249 = vweird.f32 %v242
      %vm250 = vweird.f32 %v243
      %vm251 = vmor %vm249, %vm250
      %v252 = vsel %vm251, %v243, %v248
      %v253 = vsub.f32 %v202, %v237
      %v254 = vsub.f32 %v203, %v237
      %v255 = vsub.f32 %v204, %v237
      %v256 = vsub.f32 %v205, %v237
      %v257 = vmul.f32 %v253, %v252
      %v258 = vmul.f32 %v254, %v252
      %v259 = vmul.f32 %v255, %v252
      %v260 = vmul.f32 %v256, %v252
      %v261 = vld [vmem:[%s1] sm:$0xff]
      %v262 = vld [vmem:[%s1 + $0x8] sm:$0xff]
      %v263 = vld [vmem:[%s1 + $0x10] sm:$0xff]
      %v264 = vld [vmem:[%s1 + $0x18] sm:$0xff]
      %v265 = vld [vmem:[%s1 + $0x20] sm:$0xff]
      %v266 = vld [vmem:[%s1 + $0x28] sm:$0xff]
      %v267 = vld [vmem:[%s1 + $0x30] sm:$0xff]
      %v268 = vld [vmem:[%s1 + $0x38] sm:$0xff]
      %v269 = vld [vmem:[%s1 + $0x40] sm:$0xff]
      %v270 = vld [vmem:[%s1 + $0x48] sm:$0xff]
      %v271 = vld [vmem:[%s1 + $0x50] sm:$0xff]
      %v272 = vld [vmem:[%s1 + $0x58] sm:$0xff]
      %v273 = vld [vmem:[%s2] sm:$0xff]
      %v274 = vld [vmem:[%s2 + $0x8] sm:$0xff]
      %v275 = vld [vmem:[%s2 + $0x10] sm:$0xff]
      %v276 = vld [vmem:[%s2 + $0x18] sm:$0xff]
      %v277 = vld [vmem:[%s2 + $0x20] sm:$0xff]
      %v278 = vld [vmem:[%s2 + $0x28] sm:$0xff]
      %v279 = vld [vmem:[%s2 + $0x30] sm:$0xff]
      %v280 = vld [vmem:[%s2 + $0x38] sm:$0xff]
      %v281 = vld [vmem:[%s2 + $0x40] sm:$0xff]
      %v282 = vld [vmem:[%s2 + $0x48] sm:$0xff]
      %v283 = vld [vmem:[%s2 + $0x50] sm:$0xff]
      %v284 = vld [vmem:[%s2 + $0x58] sm:$0xff]
      %286 = vset.pattern.permute.xlu0 0
      %287 = vperm.xlu0 %286, %v273
      %v288 = vpop.permute.xlu0 %287
      %291 = vset.pattern.permute.xlu0 0
      %292 = vperm.xlu0 %291, %v274
      %v293 = vpop.permute.xlu0 %292
      %296 = vset.pattern.permute.xlu0 0
      %297 = vperm.xlu0 %296, %v275
      %v298 = vpop.permute.xlu0 %297
      %301 = vset.pattern.permute.xlu0 0
      %302 = vperm.xlu0 %301, %v276
      %v303 = vpop.permute.xlu0 %302
      %306 = vset.pattern.permute.xlu0 0
      %307 = vperm.xlu0 %306, %v277
      %v308 = vpop.permute.xlu0 %307
      %311 = vset.pattern.permute.xlu0 0
      %312 = vperm.xlu0 %311, %v278
      %v313 = vpop.permute.xlu0 %312
      %316 = vset.pattern.permute.xlu0 0
      %317 = vperm.xlu0 %316, %v279
      %v318 = vpop.permute.xlu0 %317
      %321 = vset.pattern.permute.xlu0 0
      %322 = vperm.xlu0 %321, %v280
      %v323 = vpop.permute.xlu0 %322
      %326 = vset.pattern.permute.xlu0 0
      %327 = vperm.xlu0 %326, %v281
      %v328 = vpop.permute.xlu0 %327
      %331 = vset.pattern.permute.xlu0 0
      %332 = vperm.xlu0 %331, %v282
      %v333 = vpop.permute.xlu0 %332
      %336 = vset.pattern.permute.xlu0 0
      %337 = vperm.xlu0 %336, %v283
      %v338 = vpop.permute.xlu0 %337
      %341 = vset.pattern.permute.xlu0 0
      %342 = vperm.xlu0 %341, %v284
      %v343 = vpop.permute.xlu0 %342
      %vm345 = vcmask 261120
      %v347 = vsel %vm345, %v261, 0
      %v350 = vsel %vm345, %v262, 0
      %v353 = vsel %vm345, %v263, 0
      %v356 = vsel %vm345, %v264, 0
      %v359 = vsel %vm345, %v265, 0
      %v362 = vsel %vm345, %v266, 0
      %v365 = vsel %vm345, %v267, 0
      %v368 = vsel %vm345, %v268, 0
      %v371 = vsel %vm345, %v269, 0
      %v374 = vsel %vm345, %v270, 0
      %v377 = vsel %vm345, %v271, 0
      %v380 = vsel %vm345, %v272, 0
      %382 = vmatpush.msra.mxu0 0.0
      %383 = vmatpush.msra.mxu0 0.0
      %384 = vmatpush.msra.mxu0 0.0
      %385 = vmatpush.msra.mxu0 0.0
      %386 = vmatpush.msra.mxu0 0.0
      %387 = vmatpush.msra.mxu0 0.0
      %388 = vmatpush.msra.mxu0 0.0
      %389 = vmatpush.msra.mxu0 0.0
      %390 = vmatpush.msra.mxu0 0.0
      %391 = vmatpush.msra.mxu0 0.0
      %392 = vmatpush.msra.mxu0 0.0
      %393 = vmatpush.msra.mxu0 0.0
      %394 = vmatpush.msra.mxu0 %v260
      %395 = vmatpush.msra.mxu0 %v259
      %396 = vmatpush.msra.mxu0 %v258
      %397 = vmatpush.msra.mxu0 %v257
      %398 = vmatmul.f32.gmra.mxu0 %v347
      %v399 = vpop.f32.mrf.mxu0
      %v400 = vadd.f32 %v288, %v399
      %401 = vmatmul.f32.gmra.mxu0 %v350
      %v402 = vpop.f32.mrf.mxu0
      %v403 = vadd.f32 %v293, %v402
      %404 = vmatmul.f32.gmra.mxu0 %v353
      %v405 = vpop.f32.mrf.mxu0
      %v406 = vadd.f32 %v298, %v405
      %407 = vmatmul.f32.gmra.mxu0 %v356
      %v408 = vpop.f32.mrf.mxu0
      %v409 = vadd.f32 %v303, %v408
      %410 = vmatmul.f32.gmra.mxu0 %v359
      %v411 = vpop.f32.mrf.mxu0
      %v412 = vadd.f32 %v308, %v411
      %413 = vmatmul.f32.gmra.mxu0 %v362
      %v414 = vpop.f32.mrf.mxu0
      %v415 = vadd.f32 %v313, %v414
      %416 = vmatmul.f32.gmra.mxu0 %v365
      %v417 = vpop.f32.mrf.mxu0
      %v418 = vadd.f32 %v318, %v417
      %419 = vmatmul.f32.gmra.mxu0 %v368
      %v420 = vpop.f32.mrf.mxu0
      %v421 = vadd.f32 %v323, %v420
      %422 = vmatmul.f32.gmra.mxu0 %v371
      %v423 = vpop.f32.mrf.mxu0
      %v424 = vadd.f32 %v328, %v423
      %425 = vmatmul.f32.gmra.mxu0 %v374
      %v426 = vpop.f32.mrf.mxu0
      %v427 = vadd.f32 %v333, %v426
      %428 = vmatmul.f32.gmra.mxu0 %v377
      %v429 = vpop.f32.mrf.mxu0
      %v430 = vadd.f32 %v338, %v429
      %431 = vmatmul.f32.gmra.mxu0 %v380
      %v432 = vpop.f32.mrf.mxu0
      %v433 = vadd.f32 %v343, %v432
      %434 = vdwg.mxu0
      %v435 = vpack.c.bf16 %v400, %v400
      %v436 = vpack.c.bf16 %v403, %v403
      %v437 = vpack.c.bf16 %v406, %v406
      %v438 = vpack.c.bf16 %v409, %v409
      %v439 = vpack.c.bf16 %v412, %v412
      %v440 = vpack.c.bf16 %v415, %v415
      %v441 = vpack.c.bf16 %v418, %v418
      %v442 = vpack.c.bf16 %v421, %v421
      %v443 = vpack.c.bf16 %v424, %v424
      %v444 = vpack.c.bf16 %v427, %v427
      %v445 = vpack.c.bf16 %v430, %v430
      %v446 = vpack.c.bf16 %v433, %v433
      %vm447 = vcmask 519168
      %448 = vst.msk [vmem:[%s201] sm:$0xf] %vm447, %v435
      %449 = vst.msk [vmem:[%s201 + $0x4] sm:$0xf] %vm447, %v436
      %450 = vst.msk [vmem:[%s201 + $0x8] sm:$0xf] %vm447, %v437
      %451 = vst.msk [vmem:[%s201 + $0xc] sm:$0xf] %vm447, %v438
      %452 = vst.msk [vmem:[%s201 + $0x10] sm:$0xf] %vm447, %v439
      %453 = vst.msk [vmem:[%s201 + $0x14] sm:$0xf] %vm447, %v440
      %454 = vst.msk [vmem:[%s201 + $0x18] sm:$0xf] %vm447, %v441
      %455 = vst.msk [vmem:[%s201 + $0x1c] sm:$0xf] %vm447, %v442
      %456 = vst.msk [vmem:[%s201 + $0x20] sm:$0xf] %vm447, %v443
      %457 = vst.msk [vmem:[%s201 + $0x24] sm:$0xf] %vm447, %v444
      %458 = vst.msk [vmem:[%s201 + $0x28] sm:$0xf] %vm447, %v445
      %459 = vst.msk [vmem:[%s201 + $0x2c] sm:$0xf] %vm447, %v446
      %p460 = scmp.lt.s32.totalorder %s18, 1
      %s461 = scalar_select %p460, %s18, 1
      %p462 = scmp.lt.s32.totalorder %s19, 0
      %s463 = scalar_select %p462, %s19, 0
      %s464 = smul.addr %s461, 12
      %s465 = sadd.s32 %s463, %s464
      %s466 = smul.addr %s465, 4
      %s467 = scalar_lea.vmem %s3, %s466
      // Predicated region
      $region33: #{tpu_custom_call.1} parent=31 // pred_check
        %p468 = pneg %p116
      $region34: #{tpu_custom_call.1} parent=31 // pred_check_branch
        %470 = sbr.rel (%p468) target = $region36
      $region35: #{tpu_custom_call.1} parent=31 // pred_region
        _
      $region36: #{tpu_custom_call.1} parent=31 // pred_fallthru
        _
    $region32: #{tpu_custom_call.1} parent=5 // pred_fallthru
      _
    %p471 = scmp.le.s32.totalorder 2, %s9
    // Predicated region
    $region37: #{tpu_custom_call.1} parent=5 // pred_check
      %p472 = pneg %p471
    $region38: #{tpu_custom_call.1} parent=5 // pred_check_branch
      %474 = sbr.rel (%p472) target = $region40
    $region39: #{tpu_custom_call.1} parent=5 // pred_region
      %s475 = ssub.s32 %s9, 2
      // Predicated region
      $region41: #{tpu_custom_call.1} parent=39 // pred_check
        %p476 = pneg %p122
      $region42: #{tpu_custom_call.1} parent=39 // pred_check_branch
        %478 = sbr.rel (%p476) target = $region44
      $region43: #{tpu_custom_call.1} parent=39 // pred_region
        %p479 = scmp.lt.s32.totalorder %s20, 1
        %s480 = scalar_select %p479, %s20, 1
        %p481 = scmp.lt.s32.totalorder %s21, 0
        %s482 = scalar_select %p481, %s21, 0
        %s483 = smul.addr %s480, 12
        %s484 = sadd.s32 %s482, %s483
        %s485 = smul.addr %s484, 4
        %s486 = scalar_lea.vmem %s3, %s485
      $region44: #{tpu_custom_call.1} parent=39 // pred_fallthru
        _
    $region40: #{tpu_custom_call.1} parent=5 // pred_fallthru
      _
  $region6: #{tpu_custom_call.1} parent=0 // loop_footer
    %s13 = sadd.s32 1, %s9
  $region7: #{tpu_custom_call.1} parent=0 // loop_footer_branch
    %8 = sbr.rel target = $region3
  $region8: #{tpu_custom_call.1} parent=0 // loop_exit
    _

</llo_original>
